<compile_context>
chip_gen: v7x
topology: tpu7x:2x2x1
jax: 0.10.0
libtpu: 0.0.40
codegen_flags: <defaults>
</compile_context>

<pallas_src>
import functools

import jax
import jax.numpy as jnp
from jax.experimental import pallas as pl
from jax.experimental.pallas import tpu as pltpu


def _round_up(n, m):
    return ((n + m - 1) // m) * m


def _default_vmem_limit():
    # 75% of the chip's VMEM, capped at 96 MiB (v7x: 64 MiB/TC, v5e/v6e: 128).
    try:
        cap = pltpu.get_tpu_info().vmem_capacity_bytes
        return int(min(96 * 1024 * 1024, cap * 3 // 4))
    except Exception:
        return 48 * 1024 * 1024


_VMEM_LIMIT = _default_vmem_limit()


# --------------------------------------------------------------------------- #
# Generic fused conv / linear stage kernel (stride=1), channels-last.
# --------------------------------------------------------------------------- #
def _conv_stage_kernel(*refs, taps, pad_left, t_valid, relu, has_affine,
                       has_bias, maxpool, with_stats):
    it = iter(refs)
    x_ref = next(it)                              # (1, T_blk, C_in) (resident)
    w_ref = next(it)                              # (taps*C_in, C_out_p) bf16
    scale_ref = next(it) if has_affine else None  # (1, C_in) f32
    shift_ref = next(it) if has_affine else None  # (1, C_in) f32
    bias_ref = next(it) if has_bias else None     # (1, C_out_p) f32
    o_ref = next(it)                              # (1, TT, C_out_p)
    stats_ref = next(it) if with_stats else None  # (1, 2, C_out_p) f32
    xz_ref = next(it)                             # (SLEN, C_in) bf16
    xz2_ref = next(it) if taps > 1 else None      # (T_pad, taps*C_in) bf16

    tt = o_ref.shape[1]
    c_in = x_ref.shape[2]
    slen = xz_ref.shape[0]
    t_tile = pl.program_id(1)

    @pl.when(t_tile == 0)
    def _build():
        # Zero only the pad margins of the "same"-padded sequence scratch.
        if pad_left > 0:
            xz_ref[pl.ds(0, pad_left), :] = jnp.zeros(
                (pad_left, c_in), xz_ref.dtype)
        tail = slen - (pad_left + t_valid)
        if tail > 0:
            xz_ref[pl.ds(pad_left + t_valid, tail), :] = jnp.zeros(
                (tail, c_in), xz_ref.dtype)
        xv = x_ref[0][:t_valid]
        if has_affine or maxpool:
            xv = xv.astype(jnp.float32)
            if has_affine:      # fold previous-stage BatchNorm scale/shift
                xv = xv * scale_ref[...] + shift_ref[...]
            if maxpool:         # MaxPool1d(2,1,pad=1)[:T]: max(x[t-1], x[t])
                prev = jnp.concatenate([xv[:1], xv[:-1]], axis=0)
                xv = jnp.maximum(xv, prev)
        xz_ref[pl.ds(pad_left, t_valid), :] = xv.astype(xz_ref.dtype)
        if taps > 1:            # im2col: taps pre-shifted copies, built once
            n_rows = xz2_ref.shape[0]
            for w in range(taps):
                xz2_ref[:, pl.ds(w * c_in, c_in)] = xz_ref[pl.ds(w, n_rows), :]

    t0 = pl.multiple_of(t_tile * tt, tt)
    if taps > 1:
        slab = xz2_ref[pl.ds(t0, tt), :]   # one contiguous, sublane-aligned load
    else:
        slab = xz_ref[pl.ds(t0, tt), :]
    acc = jnp.dot(slab, w_ref[...], preferred_element_type=jnp.float32)
    if has_bias:
        acc = acc + bias_ref[...]
    if relu:
        acc = jnp.maximum(acc, 0.0)
    o_ref[0] = acc.astype(o_ref.dtype)
    if with_stats:                         # partial BatchNorm statistics
        rows = jax.lax.broadcasted_iota(jnp.int32, acc.shape, 0) + t0
        av = jnp.where(rows < t_valid, acc, 0.0)
        s1 = jnp.sum(av, axis=0, keepdims=True)
        s2 = jnp.sum(av * av, axis=0, keepdims=True)
        stats_ref[0] = jnp.concatenate([s1, s2], axis=0)


def conv_stage(x, w_flat, c_out_p, *, taps, pad_left, t_valid, relu=False,
               scale=None, shift=None, maxpool=False, bias=None,
               with_stats=False, out_dtype=jnp.bfloat16, time_tile=512):
    """Fused Conv1d / Linear stage on channels-last input.

    x      : (B, T_phys, C_in) - only rows [0, t_valid) are read; padded
             channels beyond the true channel count must be zero.
    w_flat : (taps*C_in, c_out_p) bf16 tap-major flattened weight.
    Returns (out (B, T_pad, c_out_p) out_dtype, stats (2, c_out_p) f32 | None)
    where stats = [sum, sum-of-squares] over the (B, t_valid) rows.
    """
    B, T_phys, c_in = x.shape
    assert w_flat.shape == (taps * c_in, c_out_p), (w_flat.shape, taps, c_in)
    TT = min(time_tile, _round_up(t_valid, 8))
    nT = -(-t_valid // TT)
    T_pad = nT * TT
    SLEN = _round_up(T_pad + taps - 1, 8)
    T_blk = min(T_phys, _round_up(t_valid, 8))
    has_affine = scale is not None
    has_bias = bias is not None

    xb = x if x.dtype == jnp.bfloat16 else x.astype(jnp.bfloat16)

    in_specs = [
        # Full valid sequence of one batch element; constant over the time grid
        # axis -> fetched once per batch element, stays VMEM-resident.
        # TODO(synk): halo-tile the input for very long sequences (v7x VMEM).
        pl.BlockSpec((1, T_blk, c_in), lambda b, t: (b, 0, 0)),
        # Weight constant over the whole grid -> VMEM-resident.
        pl.BlockSpec((taps * c_in, c_out_p), lambda b, t: (0, 0)),
    ]
    operands = [xb, w_flat]
    if has_affine:
        in_specs += [pl.BlockSpec((1, c_in), lambda b, t: (0, 0)),
                     pl.BlockSpec((1, c_in), lambda b, t: (0, 0))]
        operands += [scale.reshape(1, c_in).astype(jnp.float32),
                     shift.reshape(1, c_in).astype(jnp.float32)]
    if has_bias:
        in_specs.append(pl.BlockSpec((1, c_out_p), lambda b, t: (0, 0)))
        operands.append(bias.reshape(1, c_out_p).astype(jnp.float32))

    out_shape = [jax.ShapeDtypeStruct((B, T_pad, c_out_p), out_dtype)]
    out_specs = [pl.BlockSpec((1, TT, c_out_p), lambda b, t: (b, t, 0))]
    if with_stats:
        out_shape.append(jax.ShapeDtypeStruct((B * nT, 2, c_out_p), jnp.float32))
        out_specs.append(
            pl.BlockSpec((1, 2, c_out_p), lambda b, t: (b * nT + t, 0, 0)))

    scratch = [pltpu.VMEM((SLEN, c_in), jnp.bfloat16)]
    if taps > 1:
        scratch.append(pltpu.VMEM((T_pad, taps * c_in), jnp.bfloat16))

    kernel = functools.partial(
        _conv_stage_kernel, taps=taps, pad_left=pad_left, t_valid=t_valid,
        relu=relu, has_affine=has_affine, has_bias=has_bias, maxpool=maxpool,
        with_stats=with_stats)

    outs = pl.pallas_call(
        kernel,
        out_shape=tuple(out_shape),
        grid_spec=pltpu.PrefetchScalarGridSpec(
            num_scalar_prefetch=0,
            grid=(B, nT),
            in_specs=in_specs,
            out_specs=tuple(out_specs),
            scratch_shapes=scratch,
        ),
        compiler_params=pltpu.CompilerParams(
            # time axis must stay "arbitrary": the scratches written at
            # t_tile==0 are reused by later time tiles of the same batch elem.
            # TODO(synk): for B==1 on v7x also split time across the two cores.
            dimension_semantics=("parallel", "arbitrary"),
            vmem_limit_bytes=_VMEM_LIMIT,
        ),
    )(*operands)
    y = outs[0]
    stats = jnp.sum(outs[1], axis=0) if with_stats else None
    return y, stats


# --------------------------------------------------------------------------- #
# Weight / BatchNorm helpers.
# --------------------------------------------------------------------------- #
def _flatten_conv_weight(w, c_in_phys, c_out_p):
    """(C_out, C_in, K) torch Conv1d weight -> (K*c_in_phys, c_out_p) bf16."""
    c_out, c_in, k = w.shape
    wt = jnp.transpose(w, (2, 1, 0))
    wt = jnp.pad(wt, ((0, 0), (0, c_in_phys - c_in), (0, c_out_p - c_out)))
    return wt.reshape(k * c_in_phys, c_out_p).astype(jnp.bfloat16)


def _build_bank_weight(bank_ws, in_dim, c_out_p):
    """Embed all K bank conv weights (k=1..K, padding k//2) at their tap
    offsets in one (K*in_dim, c_out_p) matrix: the whole bank stack becomes a
    single matmul against a K-tap im2col slab."""
    K = len(bank_ws)
    W = jnp.zeros((K * in_dim, c_out_p), jnp.float32)
    for k in range(1, K + 1):
        wk = bank_ws[k - 1]                          # (in_dim, in_dim, k)
        col = (k - 1) * in_dim
        for j in range(k):
            row = (K // 2 - k // 2 + j) * in_dim
            W = W.at[row:row + in_dim, col:col + in_dim].set(wk[:, :, j].T)
    return W.astype(jnp.bfloat16)


def _bn_affine(stats, count, gamma, beta, c_valid, c_phys, eps=1e-5):
    """Training-mode BatchNorm1d -> per-channel (scale, shift), padded layout.
    TODO(synk): eval-mode running statistics are not implemented."""
    mean = stats[0, :c_valid] / count
    var = jnp.maximum(stats[1, :c_valid] / count - mean * mean, 0.0)
    scale = gamma * jax.lax.rsqrt(var + eps)
    shift = beta - mean * scale
    if c_phys > c_valid:
        scale = jnp.pad(scale, (0, c_phys - c_valid))
        shift = jnp.pad(shift, (0, c_phys - c_valid))
    return scale, shift


# --------------------------------------------------------------------------- #
# Fused residual + Highway stack kernel (4 layers, H||T weights fused).
# --------------------------------------------------------------------------- #
def _highway_kernel(y_ref, r_ref, s_ref, sh_ref, w_ref, b_ref, o_ref, *,
                    n_layers, cp):
    x = (y_ref[...].astype(jnp.float32) * s_ref[...] + sh_ref[...]
         + r_ref[...].astype(jnp.float32))
    for l in range(n_layers):
        ht = jnp.dot(x.astype(jnp.bfloat16), w_ref[l],
                     preferred_element_type=jnp.float32) + b_ref[l]
        h = jnp.maximum(ht[:, :cp], 0.0)           # H gate (ReLU)
        t = jax.nn.sigmoid(ht[:, cp:])             # T gate
        x = h * t + x * (1.0 - t)
    o_ref[...] = x.astype(o_ref.dtype)


def highway_pallas(y, res, wh, bh, wt_, bt_, *, y_scale=None, y_shift=None,
                   row_tile=1024):
    """x = y*scale + shift + res, then 4 fused Highway layers.

    y, res : (B, Tp, Cp) padded-channel layout (padded channels must be zero).
    wh/wt_ : (L, C, C) torch Linear (out, in); bh/bt_: (L, C)."""
    B, Tp, Cp = y.shape
    L, C, _ = wh.shape
    N = B * Tp
    RT = min(row_tile, N)
    RT -= RT % 8
    while N % RT:
        RT -= 8

    if y_scale is None:
        y_scale = jnp.ones((Cp,), jnp.float32)
    if y_shift is None:
        y_shift = jnp.zeros((Cp,), jnp.float32)

    # Fuse H and T weights along output dim -> one (RT, 2*Cp) matmul per layer.
    w_fused = jnp.zeros((L, Cp, 2 * Cp), jnp.float32)
    w_fused = w_fused.at[:, :C, :C].set(jnp.swapaxes(wh, 1, 2))
    w_fused = w_fused.at[:, :C, Cp:Cp + C].set(jnp.swapaxes(wt_, 1, 2))
    b_fused = jnp.zeros((L, 1, 2 * Cp), jnp.float32)
    b_fused = b_fused.at[:, 0, :C].set(bh)
    b_fused = b_fused.at[:, 0, Cp:Cp + C].set(bt_)

    out = pl.pallas_call(
        functools.partial(_highway_kernel, n_layers=L, cp=Cp),
        out_shape=jax.ShapeDtypeStruct((N, Cp), jnp.bfloat16),
        grid_spec=pltpu.PrefetchScalarGridSpec(
            num_scalar_prefetch=0,
            grid=(N // RT,),
            in_specs=[
                pl.BlockSpec((RT, Cp), lambda i: (i, 0)),
                pl.BlockSpec((RT, Cp), lambda i: (i, 0)),
                pl.BlockSpec((1, Cp), lambda i: (0, 0)),
                pl.BlockSpec((1, Cp), lambda i: (0, 0)),
                pl.BlockSpec((L, Cp, 2 * Cp), lambda i: (0, 0, 0)),
                pl.BlockSpec((L, 1, 2 * Cp), lambda i: (0, 0, 0)),
            ],
            out_specs=pl.BlockSpec((RT, Cp), lambda i: (i, 0)),
        ),
        compiler_params=pltpu.CompilerParams(
            dimension_semantics=("parallel",),
            vmem_limit_bytes=_VMEM_LIMIT,
        ),
    )(y.reshape(N, Cp), res.reshape(N, Cp),
      y_scale.reshape(1, Cp).astype(jnp.float32),
      y_shift.reshape(1, Cp).astype(jnp.float32),
      w_fused.astype(jnp.bfloat16), b_fused)
    return out.reshape(B, Tp, Cp)


# --------------------------------------------------------------------------- #
# Bidirectional GRU: Pallas input projections (fwd+bwd stacked) + one scan.
# --------------------------------------------------------------------------- #
def bigru_forward(x_pad, t_valid, gp):
    """x_pad: (B, Tp, Cp) highway output (padded layout). Returns (B, T, 2H)."""
    B, _, c_in_phys = x_pad.shape
    H = gp['fwd']['w_hh'].shape[1]
    w_ih = jnp.concatenate([gp['fwd']['w_ih'], gp['bwd']['w_ih']], axis=0)
    b_ih = jnp.concatenate([gp['fwd']['b_ih'], gp['bwd']['b_ih']], axis=0)
    c6p = _round_up(6 * H, 128)
    w_flat = _flatten_conv_weight(w_ih[:, :, None], c_in_phys, c6p)
    bias = jnp.pad(b_ih, (0, c6p - 6 * H))
    xp, _ = conv_stage(x_pad, w_flat, c6p, taps=1, pad_left=0,
                       t_valid=t_valid, bias=bias, out_dtype=jnp.float32)
    xp = xp[:, :t_valid, :6 * H]                              # (B, T, 6H) f32
    xs = jnp.stack([xp[:, :, :3 * H], xp[:, ::-1, 3 * H:]], axis=0)
    xs = jnp.moveaxis(xs, 2, 0)                               # (T, 2, B, 3H)

    w_hh = jnp.stack([gp['fwd']['w_hh'].T, gp['bwd']['w_hh'].T], axis=0)
    b_hh = jnp.stack([gp['fwd']['b_hh'], gp['bwd']['b_hh']], axis=0)[:, None, :]

    # TODO(synk): the sequential recurrence stays in lax.scan (both directions
    # batched into one scan); a VMEM-resident Pallas recurrence is future work.
    def step(h, xp_t):
        hp = jnp.einsum('dbh,dhg->dbg', h, w_hh,
                        precision=jax.lax.Precision.HIGHEST) + b_hh
        xr, xz_, xn = jnp.split(xp_t, 3, axis=-1)
        hr, hz, hn = jnp.split(hp, 3, axis=-1)
        r = jax.nn.sigmoid(xr + hr)
        z = jax.nn.sigmoid(xz_ + hz)
        n = jnp.tanh(xn + r * hn)
        h_new = (1.0 - z) * n + z * h
        return h_new, h_new

    h0 = jnp.zeros((2, B, H), jnp.float32)
    _, hs = jax.lax.scan(step, h0, xs)                        # (T, 2, B, H)
    fwd = jnp.transpose(hs[:, 0], (1, 0, 2))
    bwd = jnp.transpose(hs[:, 1], (1, 0, 2))[:, ::-1]
    return jnp.concatenate([fwd, bwd], axis=-1)


# --------------------------------------------------------------------------- #
# CBHG forward.
# --------------------------------------------------------------------------- #
def cbhg_forward(params, inputs, eps=1e-5):
    # inputs: (B, T, in_dim) channels-last.
    # TODO(synk): packed sequences (input_lengths) are not implemented.
    B, T, in_dim = inputs.shape
    K = len(params['banks'])
    KC = K * in_dim
    KC_p = _round_up(KC, 128)
    in_dim_p = _round_up(in_dim, 128)

    # 1) all K conv1d banks fused in ONE kernel (ReLU fused, BN stats emitted).
    w_bank = _build_bank_weight([p['w'] for p in params['banks']], in_dim, KC_p)
    y, stats = conv_stage(inputs, w_bank, KC_p, taps=K, pad_left=K // 2,
                          t_valid=T, relu=True, with_stats=True)
    gamma = jnp.concatenate([p['gamma'] for p in params['banks']])
    beta = jnp.concatenate([p['beta'] for p in params['banks']])
    scale, shift = _bn_affine(stats, B * T, gamma, beta, KC, KC_p, eps)

    # 2+3) bank-BN apply + maxpool(2,1,1)[:T] folded into projection conv #1;
    #      every projection's BN apply is folded into the following stage.
    c_phys = KC_p
    do_pool = True
    n_proj = len(params['projs'])
    for i, p in enumerate(params['projs']):
        c_out = p['w'].shape[0]
        c_out_p = _round_up(c_out, 128)
        w_flat = _flatten_conv_weight(p['w'], c_phys, c_out_p)
        y, stats = conv_stage(y, w_flat, c_out_p, taps=3, pad_left=1,
                              t_valid=T, relu=(i < n_proj - 1),
                              scale=scale, shift=shift, maxpool=do_pool,
                              with_stats=True)
        scale, shift = _bn_affine(stats, B * T, p['gamma'], p['beta'],
                                  c_out, c_out_p, eps)
        c_phys = c_out_p
        do_pool = False

    # 4) pre-highway Linear (bias=False) with the last BN apply folded in.
    if 'pre_highway' in params:
        w_flat = _flatten_conv_weight(params['pre_highway'][:, :, None],
                                      c_phys, in_dim_p)
        y, _ = conv_stage(y, w_flat, in_dim_p, taps=1, pad_left=0, t_valid=T,
                          scale=scale, shift=shift, out_dtype=jnp.float32)
        hw_scale = hw_shift = None
    else:
        # channel counts already match: last BN applied inside the highway.
        hw_scale, hw_shift = scale, shift

    # 5+6) residual add + 4 fused Highway layers (one kernel).
    Tp = y.shape[1]
    res = jnp.pad(inputs, ((0, 0), (0, Tp - T), (0, in_dim_p - in_dim)))
    hw = params['highway']
    y = highway_pallas(y, res, hw['wh'], hw['bh'], hw['wt'], hw['bt'],
                       y_scale=hw_scale, y_shift=hw_shift)

    # 7) bidirectional GRU.
    return bigru_forward(y, T, params['gru'])


# --------------------------------------------------------------------------- #
# Parameter init (deterministic) and references for self-checks.
# --------------------------------------------------------------------------- #
def init_cbhg_params(key, in_dim, k_banks, projections, n_highway=4):
    keys = iter(jax.random.split(key, 64))

    def uniform(shape, bound):
        return jax.random.uniform(next(keys), shape, jnp.float32, -bound, bound)

    def xavier_conv(c_out, c_in, k):
        fan_in, fan_out = c_in * k, c_out * k
        return uniform((c_out, c_in, k), (6.0 / (fan_in + fan_out)) ** 0.5)

    params = {'banks': [
        {'w': xavier_conv(in_dim, in_dim, k),
         'gamma': jnp.ones((in_dim,), jnp.float32),
         'beta': jnp.zeros((in_dim,), jnp.float32)}
        for k in range(1, k_banks + 1)]}
    in_sizes = [k_banks * in_dim] + list(projections[:-1])
    params['projs'] = [
        {'w': xavier_conv(c_out, c_in, 3),
         'gamma': jnp.ones((c_out,), jnp.float32),
         'beta': jnp.zeros((c_out,), jnp.float32)}
        for c_in, c_out in zip(in_sizes, projections)]
    if projections[-1] != in_dim:
        params['pre_highway'] = uniform((in_dim, projections[-1]),
                                        1.0 / (projections[-1] ** 0.5))
    bound_h = 1.0 / (in_dim ** 0.5)
    params['highway'] = {
        'wh': jnp.stack([uniform((in_dim, in_dim), bound_h)
                         for _ in range(n_highway)]),
        'bh': jnp.zeros((n_highway, in_dim), jnp.float32),        # H bias = 0
        'wt': jnp.stack([uniform((in_dim, in_dim), bound_h)
                         for _ in range(n_highway)]),
        'bt': jnp.full((n_highway, in_dim), -1.0, jnp.float32),   # T bias = -1
    }
    h = in_dim
    bound_g = 1.0 / (h ** 0.5)

    def gru_dir():
        return {'w_ih': uniform((3 * h, in_dim), bound_g),
                'b_ih': uniform((3 * h,), bound_g),
                'w_hh': uniform((3 * h, h), bound_g),
                'b_hh': uniform((3 * h,), bound_g)}

    params['gru'] = {'fwd': gru_dir(), 'bwd': gru_dir()}
    return params


def _bank_reference(x, bank_ws):
    xb = x.astype(jnp.bfloat16).astype(jnp.float32)
    _, T, _ = x.shape
    outs = []
    for k, w in enumerate(bank_ws, start=1):
        wb = w.astype(jnp.bfloat16).astype(jnp.float32)
        p = k // 2
        xz = jnp.pad(xb, ((0, 0), (p, k), (0, 0)))
        cols = jnp.stack([xz[:, j:j + T, :] for j in range(k)], axis=-1)
        o = jnp.einsum('btck,ock->bto', cols, wb,
                       precision=jax.lax.Precision.HIGHEST)
        outs.append(jnp.maximum(o, 0.0))
    return jnp.concatenate(outs, axis=-1)


def _proj_stage_reference(x, w, scale, shift, relu, maxpool):
    x = x.astype(jnp.float32) * scale + shift
    if maxpool:
        x = jnp.maximum(x, jnp.concatenate([x[:, :1], x[:, :-1]], axis=1))
    x = x.astype(jnp.bfloat16).astype(jnp.float32)
    wb = w.astype(jnp.bfloat16).astype(jnp.float32)
    _, T, _ = x.shape
    k = w.shape[2]
    xz = jnp.pad(x, ((0, 0), (1, k), (0, 0)))
    cols = jnp.stack([xz[:, j:j + T, :] for j in range(k)], axis=-1)
    o = jnp.einsum('btck,ock->bto', cols, wb,
                   precision=jax.lax.Precision.HIGHEST)
    return jnp.maximum(o, 0.0) if relu else o


def _highway_reference(y, res, wh, bh, wt_, bt_):
    x = y.astype(jnp.float32) + res.astype(jnp.float32)
    for l in range(wh.shape[0]):
        xb = x.astype(jnp.bfloat16).astype(jnp.float32)
        whl = wh[l].T.astype(jnp.bfloat16).astype(jnp.float32)
        wtl = wt_[l].T.astype(jnp.bfloat16).astype(jnp.float32)
        h = jnp.maximum(xb @ whl + bh[l], 0.0)
        t = jax.nn.sigmoid(xb @ wtl + bt_[l])
        x = h * t + x * (1.0 - t)
    return x


# --------------------------------------------------------------------------- #
if __name__ == "__main__":
    # Small CBHG config: batch=2, seq=16, in_dim=32, K=4 banks, proj=[64, 48].
    B, T, IN_DIM, K_BANKS = 2, 16, 32, 4
    PROJECTIONS = (64, 48)

    key = jax.random.PRNGKey(0)
    kx, kp = jax.random.split(key)
    inputs = jax.random.normal(kx, (B, T, IN_DIM), jnp.float32)
    params = init_cbhg_params(kp, IN_DIM, K_BANKS, PROJECTIONS)

    KC = K_BANKS * IN_DIM
    KC_p = _round_up(KC, 128)

    # 1) fused conv-bank kernel vs per-bank reference (matched bf16 operands).
    w_bank = _build_bank_weight([p['w'] for p in params['banks']], IN_DIM, KC_p)
    y_bank, st_bank = conv_stage(inputs, w_bank, KC_p, taps=K_BANKS,
                                 pad_left=K_BANKS // 2, t_valid=T, relu=True,
                                 with_stats=True)
    ref_bank = _bank_reference(inputs, [p['w'] for p in params['banks']])
    got_b = y_bank[:, :T, :KC].astype(jnp.float32)
    assert got_b.shape == ref_bank.shape, (got_b.shape, ref_bank.shape)
    assert bool(jnp.allclose(got_b, ref_bank, atol=3e-2, rtol=3e-2)), "bank"
    s_ref = jnp.stack([ref_bank.sum((0, 1)), (ref_bank * ref_bank).sum((0, 1))])
    assert bool(jnp.allclose(st_bank[:, :KC], s_ref, atol=0.5, rtol=5e-2)), \
        "bank stats"

    # 2) projection stage (BN apply + maxpool + 3-tap conv + ReLU fused).
    gamma = jnp.concatenate([p['gamma'] for p in params['banks']])
    beta = jnp.concatenate([p['beta'] for p in params['banks']])
    scale_b, shift_b = _bn_affine(st_bank, B * T, gamma, beta, KC, KC_p)
    w1 = params['projs'][0]['w']
    c1p = _round_up(w1.shape[0], 128)
    w1_flat = _flatten_conv_weight(w1, KC_p, c1p)
    y1, _ = conv_stage(y_bank, w1_flat, c1p, taps=3, pad_left=1, t_valid=T,
                       relu=True, scale=scale_b, shift=shift_b, maxpool=True,
                       with_stats=True)
    ref1 = _proj_stage_reference(y_bank[:, :T, :KC], w1, scale_b[:KC],
                                 shift_b[:KC], relu=True, maxpool=True)
    got1 = y1[:, :T, :w1.shape[0]].astype(jnp.float32)
    assert bool(jnp.allclose(got1, ref1, atol=3e-2, rtol=3e-2)), "projection"

    # 3) fused residual + highway kernel vs reference.
    hw = params['highway']
    IN_P = _round_up(IN_DIM, 128)
    y_t = jnp.pad(inputs, ((0, 0), (0, 0), (0, IN_P - IN_DIM)))
    r_t = jnp.pad(0.5 * inputs, ((0, 0), (0, 0), (0, IN_P - IN_DIM)))
    got_h = highway_pallas(y_t, r_t, hw['wh'], hw['bh'], hw['wt'], hw['bt'])
    ref_h = _highway_reference(inputs, 0.5 * inputs, hw['wh'], hw['bh'],
                               hw['wt'], hw['bt'])
    got_h = got_h[:, :, :IN_DIM].astype(jnp.float32)
    assert bool(jnp.allclose(got_h, ref_h, atol=3e-2, rtol=3e-2)), "highway"

    # 4) full CBHG forward.
    out = jax.block_until_ready(jax.jit(cbhg_forward)(params, inputs))
    assert out.shape == (B, T, 2 * IN_DIM), out.shape
    assert bool(jnp.all(jnp.isfinite(out)))

    print("KERNEL_OK")
</pallas_src>

<mosaic_0001>
module attributes {stable_mosaic.version = 11 : i64} {
  func.func @_conv_stage_kernel(%arg0: i32, %arg1: i32, %arg2: memref<1x16x32xbf16, #tpu.memory_space<vmem>>, %arg3: memref<128x128xbf16, #tpu.memory_space<vmem>>, %arg4: memref<1x16x128xbf16, #tpu.memory_space<vmem>>, %arg5: memref<1x2x128xf32, #tpu.memory_space<vmem>>, %arg6: memref<24x32xbf16, #tpu.memory_space<vmem>>, %arg7: memref<16x128xbf16, #tpu.memory_space<vmem>>) attributes {dimension_semantics = [#tpu.dimension_semantics<parallel>, #tpu.dimension_semantics<arbitrary>], iteration_bounds = array<i64: 2, 1>, scalar_prefetch = 0 : i64, scratch_operands = 2 : i64, tpu.core_type = #tpu.core_type<tc>, window_params = [{transform_indices = @transform_0, window_bounds = array<i64: 1, 16, 32>}, {pipeline_mode = #tpu.pipeline_mode<synchronous>, transform_indices = @transform_1, window_bounds = array<i64: 128, 128>}, {transform_indices = @transform_2, window_bounds = array<i64: 1, 16, 128>}, {transform_indices = @transform_3, window_bounds = array<i64: 1, 2, 128>}]} {
    %c0_i32 = arith.constant 0 : i32
    %0 = arith.cmpi eq, %arg1, %c0_i32 : i32
    %1 = arith.extui %0 : i1 to i32
    %c0_i32_0 = arith.constant 0 : i32
    %2 = arith.cmpi ne, %1, %c0_i32_0 : i32
    scf.if %2 {
      %cst_14 = arith.constant 0.000000e+00 : bf16
      %31 = vector.broadcast %cst_14 : bf16 to vector<2x32xbf16>
      %c0_15 = arith.constant 0 : index
      %c0_16 = arith.constant 0 : index
      %32 = vector.load %arg6[%c0_15, %c0_16] : memref<24x32xbf16, #tpu.memory_space<vmem>>, vector<2x32xbf16>
      tpu.vector_store %arg6[%c0_15, %c0_16], %31 {strides = array<i32>} : memref<24x32xbf16, #tpu.memory_space<vmem>>, vector<2x32xbf16>,
      %cst_17 = arith.constant 0.000000e+00 : bf16
      %33 = vector.broadcast %cst_17 : bf16 to vector<6x32xbf16>
      %c18 = arith.constant 18 : index
      %c0_18 = arith.constant 0 : index
      %34 = vector.load %arg6[%c18, %c0_18] : memref<24x32xbf16, #tpu.memory_space<vmem>>, vector<6x32xbf16>
      tpu.vector_store %arg6[%c18, %c0_18], %33 {strides = array<i32>} : memref<24x32xbf16, #tpu.memory_space<vmem>>, vector<6x32xbf16>,
      %c0_19 = arith.constant 0 : index
      %c0_20 = arith.constant 0 : index
      %c0_21 = arith.constant 0 : index
      %35 = vector.load %arg2[%c0_19, %c0_20, %c0_21] : memref<1x16x32xbf16, #tpu.memory_space<vmem>>, vector<1x16x32xbf16>
      %36 = vector.shape_cast %35 : vector<1x16x32xbf16> to vector<16x32xbf16>
      %c2 = arith.constant 2 : index
      %c0_22 = arith.constant 0 : index
      %37 = vector.load %arg6[%c2, %c0_22] : memref<24x32xbf16, #tpu.memory_space<vmem>>, vector<16x32xbf16>
      tpu.vector_store %arg6[%c2, %c0_22], %36 {strides = array<i32>} : memref<24x32xbf16, #tpu.memory_space<vmem>>, vector<16x32xbf16>,
      %c0_23 = arith.constant 0 : index
      %c0_24 = arith.constant 0 : index
      %38 = vector.load %arg6[%c0_23, %c0_24] : memref<24x32xbf16, #tpu.memory_space<vmem>>, vector<16x32xbf16>
      %c0_25 = arith.constant 0 : index
      %c0_26 = arith.constant 0 : index
      %39 = vector.load %arg7[%c0_25, %c0_26] : memref<16x128xbf16, #tpu.memory_space<vmem>>, vector<16x32xbf16>
      tpu.vector_store %arg7[%c0_25, %c0_26], %38 {strides = array<i32>} : memref<16x128xbf16, #tpu.memory_space<vmem>>, vector<16x32xbf16>,
      %c1 = arith.constant 1 : index
      %c0_27 = arith.constant 0 : index
      %40 = vector.load %arg6[%c1, %c0_27] : memref<24x32xbf16, #tpu.memory_space<vmem>>, vector<16x32xbf16>
      %c0_28 = arith.constant 0 : index
      %c32 = arith.constant 32 : index
      %41 = vector.load %arg7[%c0_28, %c32] : memref<16x128xbf16, #tpu.memory_space<vmem>>, vector<16x32xbf16>
      tpu.vector_store %arg7[%c0_28, %c32], %40 {strides = array<i32>} : memref<16x128xbf16, #tpu.memory_space<vmem>>, vector<16x32xbf16>,
      %c2_29 = arith.constant 2 : index
      %c0_30 = arith.constant 0 : index
      %42 = vector.load %arg6[%c2_29, %c0_30] : memref<24x32xbf16, #tpu.memory_space<vmem>>, vector<16x32xbf16>
      %c0_31 = arith.constant 0 : index
      %c64 = arith.constant 64 : index
      %43 = vector.load %arg7[%c0_31, %c64] : memref<16x128xbf16, #tpu.memory_space<vmem>>, vector<16x32xbf16>
      tpu.vector_store %arg7[%c0_31, %c64], %42 {strides = array<i32>} : memref<16x128xbf16, #tpu.memory_space<vmem>>, vector<16x32xbf16>,
      %c3 = arith.constant 3 : index
      %c0_32 = arith.constant 0 : index
      %44 = vector.load %arg6[%c3, %c0_32] : memref<24x32xbf16, #tpu.memory_space<vmem>>, vector<16x32xbf16>
      %c0_33 = arith.constant 0 : index
      %c96 = arith.constant 96 : index
      %45 = vector.load %arg7[%c0_33, %c96] : memref<16x128xbf16, #tpu.memory_space<vmem>>, vector<16x32xbf16>
      tpu.vector_store %arg7[%c0_33, %c96], %44 {strides = array<i32>} : memref<16x128xbf16, #tpu.memory_space<vmem>>, vector<16x32xbf16>,
    } else {
    }
    %c16_i32 = arith.constant 16 : i32
    %3 = arith.muli %arg1, %c16_i32 : i32
    %4 = tpu.assume_multiple %3, 16 : i32
    %5 = arith.index_cast %4 : i32 to index
    %c0 = arith.constant 0 : index
    %6 = vector.load %arg7[%5, %c0] : memref<16x128xbf16, #tpu.memory_space<vmem>>, vector<16x128xbf16>
    %c0_1 = arith.constant 0 : index
    %c0_2 = arith.constant 0 : index
    %7 = vector.load %arg3[%c0_1, %c0_2] : memref<128x128xbf16, #tpu.memory_space<vmem>>, vector<128x128xbf16>
    %cst = arith.constant dense<0.000000e+00> : vector<16x128xf32>
    %8 = tpu.matmul %6, %7, %cst {dimension_numbers = #tpu.dot_dimension_numbers<[1], [0], [0], [1], [0, 0, 1, 1], [], []>} : vector<16x128xbf16>, vector<128x128xbf16>, vector<16x128xf32> -> vector<16x128xf32>
    %cst_3 = arith.constant 0.000000e+00 : f32
    %9 = vector.broadcast %cst_3 : f32 to vector<16x128xf32>
    %10 = arith.maximumf %8, %9 : vector<16x128xf32>
    %11 = arith.truncf %10 : vector<16x128xf32> to vector<16x128xbf16>
    %c0_4 = arith.constant 0 : index
    %c0_5 = arith.constant 0 : index
    %c0_6 = arith.constant 0 : index
    %12 = vector.load %arg4[%c0_4, %c0_5, %c0_6] : memref<1x16x128xbf16, #tpu.memory_space<vmem>>, vector<1x16x128xbf16>
    %13 = vector.shape_cast %12 : vector<1x16x128xbf16> to vector<16x128xbf16>
    %14 = vector.shape_cast %11 : vector<16x128xbf16> to vector<1x16x128xbf16>
    tpu.vector_store %arg4[%c0_4, %c0_5, %c0_6], %14 {strides = array<i32>} : memref<1x16x128xbf16, #tpu.memory_space<vmem>>, vector<1x16x128xbf16>,
    %15 = tpu.iota {dimensions = array<i32: 0>} : vector<16x128xi32>
    %16 = vector.broadcast %4 : i32 to vector<16x128xi32>
    %17 = arith.addi %15, %16 : vector<16x128xi32>
    %c16_i32_7 = arith.constant 16 : i32
    %18 = vector.broadcast %c16_i32_7 : i32 to vector<16x128xi32>
    %19 = arith.cmpi slt, %17, %18 : vector<16x128xi32>
    %cst_8 = arith.constant 0.000000e+00 : f32
    %20 = vector.broadcast %cst_8 : f32 to vector<16x128xf32>
    %21 = arith.select %19, %10, %20 : vector<16x128xi1>, vector<16x128xf32>
    %cst_9 = arith.constant dense<0.000000e+00> : vector<128xf32>
    %22 = vector.multi_reduction <add>, %21, %cst_9 [0] : vector<16x128xf32> to vector<128xf32>
    %23 = vector.shape_cast %22 : vector<128xf32> to vector<1x128xf32>
    %24 = arith.mulf %21, %21 : vector<16x128xf32>
    %cst_10 = arith.constant dense<0.000000e+00> : vector<128xf32>
    %25 = vector.multi_reduction <add>, %24, %cst_10 [0] : vector<16x128xf32> to vector<128xf32>
    %26 = vector.shape_cast %25 : vector<128xf32> to vector<1x128xf32>
    %27 = tpu.concatenate %23, %26 in 0 : vector<1x128xf32>, vector<1x128xf32> -> vector<2x128xf32>
    %c0_11 = arith.constant 0 : index
    %c0_12 = arith.constant 0 : index
    %c0_13 = arith.constant 0 : index
    %28 = vector.load %arg5[%c0_11, %c0_12, %c0_13] : memref<1x2x128xf32, #tpu.memory_space<vmem>>, vector<1x2x128xf32>
    %29 = vector.shape_cast %28 : vector<1x2x128xf32> to vector<2x128xf32>
    %30 = vector.shape_cast %27 : vector<2x128xf32> to vector<1x2x128xf32>
    tpu.vector_store %arg5[%c0_11, %c0_12, %c0_13], %30 {strides = array<i32>} : memref<1x2x128xf32, #tpu.memory_space<vmem>>, vector<1x2x128xf32>,
    return
  }
  func.func @transform_0(%arg0: i32, %arg1: i32) -> (i32, i32, i32) {
    %c0_i32 = arith.constant 0 : i32
    %c0_i32_0 = arith.constant 0 : i32
    %c0_i32_1 = arith.constant 0 : i32
    return %arg0, %c0_i32, %c0_i32_0 : i32, i32, i32
  }
  func.func @transform_1(%arg0: i32, %arg1: i32) -> (i32, i32) {
    %c0_i32 = arith.constant 0 : i32
    %c0_i32_0 = arith.constant 0 : i32
    %c0_i32_1 = arith.constant 0 : i32
    return %c0_i32, %c0_i32_0 : i32, i32
  }
  func.func @transform_2(%arg0: i32, %arg1: i32) -> (i32, i32, i32) {
    %c0_i32 = arith.constant 0 : i32
    %c0_i32_0 = arith.constant 0 : i32
    return %arg0, %arg1, %c0_i32 : i32, i32, i32
  }
  func.func @transform_3(%arg0: i32, %arg1: i32) -> (i32, i32, i32) {
    %c1_i32 = arith.constant 1 : i32
    %0 = arith.muli %arg0, %c1_i32 : i32
    %1 = arith.addi %0, %arg1 : i32
    %c0_i32 = arith.constant 0 : i32
    %c0_i32_0 = arith.constant 0 : i32
    %c0_i32_1 = arith.constant 0 : i32
    return %1, %c0_i32, %c0_i32_0 : i32, i32, i32
  }
}

</mosaic_0001>

<llo_original>
// kernel: tpu_custom_call.1
$region0: #{tpu_custom_call.1}
  #allocation0 [shape = 'u32[]', space=smem, size = 0x4, offset = 0x4, fixed_abs, tag = 'smem constant byte address 0x4 - core index']
  #allocation1 [shape = 'u32[144,128]{1,0:T(1,128)}', space=vmem, size = 0x12000, scoped, tag = 'internal scratch']
  #allocation2 [shape = 'bf16[24,32]{1,0:T(8,128)(2,1)}', space=vmem, size = 0x1800, scoped, tag = 'scratch operand']
  #allocation3 [shape = 'bf16[16,128]{1,0:T(16,128)(2,1)}', space=vmem, size = 0x1000, scoped, tag = 'scratch operand']
  %s0 = inlined_call_operand.hbm [shape: bf16[2,16,32], index: 0, kind: input, shape index: {}]
  %s1 = inlined_call_operand.hbm [shape: bf16[128,128], index: 1, kind: input, shape index: {}]
  %s2 = inlined_call_operand.hbm [shape: bf16[2,16,128], index: 2, kind: output, shape index: {0}]
  %s3 = inlined_call_operand.hbm [shape: f32[2,2,128], index: 3, kind: output, shape index: {1}]
  %4 = xla_tuple %s2, %s3
  %s5 = sld [smem:[#allocation0]]
  $region61: #{tpu_custom_call.1} parent=0
    _
  %s7 = ssub.s32 1, %s5
  %s8 = scalar_select 0, %s7, %s5
  $region1: #{tpu_custom_call.1} parent=0
    #allocation4 [shape = 'u8[8192]{0}', space=vmem, size = 0x2000, scoped, tag = 'input window, operand 0']
    #allocation5 [shape = 's32[2]{0}', space=sflag, size = 0x8, scoped, tag = 'scoped memory for tpu_custom_call.1']
    #allocation6 [shape = 's32[2]{0}', space=sflag, size = 0x8, scoped, tag = 'scoped memory for tpu_custom_call.1']
    #allocation7 [shape = 'u8[32768]{0}', space=vmem, size = 0x8000, scoped, tag = 'input window, operand 1, single buffered']
    #allocation8 [shape = 's32[1]{0}', space=sflag, size = 0x4, scoped, tag = 'scoped memory for tpu_custom_call.1']
    #allocation9 [shape = 'u8[8192]{0}', space=vmem, size = 0x2000, scoped, tag = 'output window, operand 0']
    #allocation10 [shape = 'u8[2048]{0}', space=vmem, size = 0x800, scoped, tag = 'output window, operand 1']
    #allocation11 [shape = 's32[2]{0}', space=sflag, size = 0x8, scoped, tag = 'scoped memory for tpu_custom_call.1']
    %9 = vsyncpa [#allocation5], 0
    %s10 = scalar_lea.sflag [#allocation5], 1
    %11 = vsyncpa %s10, 0
    %12 = vsyncpa [#allocation8], 0
    %13 = vsyncpa [#allocation6], 0
    %s14 = scalar_lea.sflag [#allocation6], 1
    %15 = vsyncpa %s14, 0
    %16 = vsyncpa [#allocation11], 0
    %s17 = scalar_lea.sflag [#allocation11], 1
    %18 = vsyncpa %s17, 0
    loop: start=0, step=1, limit=4
    $region2: #{tpu_custom_call.1} parent=1 // loop_pre_header
      _
    $region3: #{tpu_custom_call.1} parent=1 // loop_header
      %s20 = sphi 0, %s24
      %p21 = scmp.ge.s32.totalorder %s20, 4
      %s27 = sphi 0, %s39
      %s28 = sphi 0, %s35
      %s29 = sphi 0, %s27
      %s30 = sphi 0, %s28
      %s31 = sphi 0, %s29
      %s32 = sphi 0, %s30
      %s42 = sphi 0, %s44
      %s45 = sphi 0, %s42
      %s46 = sphi 0, %s45
      %s62 = sphi 0, %s46
      %s66 = sphi 0, %s66
      %s68 = sphi 0, %s66
      %s69 = sphi 0, %s68
      %s83 = sphi 0, %s69
      %s91 = sphi 0, %s93
      %s94 = sphi 0, %s91
      %s95 = sphi 0, %s94
      %s111 = sphi 0, %s95
      %s119 = sphi 0, %s121
      %s122 = sphi 0, %s119
      %s123 = sphi 0, %s122
      %s139 = sphi 0, %s123
    $region4: #{tpu_custom_call.1} parent=1 // loop_header_branch
      %23 = sbr.rel (%p21) target = $region8
    $region5: #{tpu_custom_call.1} parent=1 // loop_body
      %s25 = ssub.s32 %s20, 1
      %s26 = ssub.s32 %s20, 2
      %s33 = sadd.s32 1, %s28
      %p34 = scmp.ge.s32.totalorder %s33, 1
      %s35 = scalar_select %p34, 0, %s33
      %s36 = sadd.s32 1, %s27
      %s37 = scalar_select %p34, %s36, %s27
      %p38 = scmp.ge.s32.totalorder %s37, 2
      %s39 = scalar_select %p38, 0, %s37
      %s40 = ssub.s32 %s27, %s39
      %p41 = scmp.eq.s32.totalorder %s40, 0
      %s43 = sadd.s32 %s42, 1
      %s44 = scalar_select %p41, %s42, %s43
      %p47 = pneg %p41
      %p48 = scmp.eq.s32.totalorder %s20, 1
      %p49 = por %p47, %p48
      %p50 = scmp.ne.s32.totalorder %s42, %s45
      %p51 = scmp.eq.s32.totalorder %s20, 0
      %p52 = por %p50, %p51
      %p53 = scmp.ne.s32.totalorder %s42, %s45
      %p54 = scmp.eq.s32.totalorder %s25, 1
      %p55 = por %p53, %p54
      %p56 = scmp.ne.s32.totalorder %s45, %s46
      %p57 = scmp.eq.s32.totalorder %s25, 0
      %p58 = por %p56, %p57
      %p59 = scmp.ne.s32.totalorder %s45, %s46
      %p60 = scmp.eq.s32.totalorder %s26, 1
      %p61 = por %p59, %p60
      %p63 = scmp.ne.s32.totalorder %s46, %s62
      %p64 = scmp.eq.s32.totalorder %s26, 0
      %p65 = por %p63, %p64
      %s67 = sadd.s32 %s66, 1
      %p70 = scmp.eq.s32.totalorder %s20, 1
      %p71 = scmp.ne.s32.totalorder %s66, %s68
      %p72 = scmp.eq.s32.totalorder %s20, 0
      %p73 = por %p71, %p72
      %p74 = scmp.ne.s32.totalorder %s66, %s68
      %p75 = scmp.eq.s32.totalorder %s25, 1
      %p76 = por %p74, %p75
      %p77 = scmp.ne.s32.totalorder %s68, %s69
      %p78 = scmp.eq.s32.totalorder %s25, 0
      %p79 = por %p77, %p78
      %p80 = scmp.ne.s32.totalorder %s68, %s69
      %p81 = scmp.eq.s32.totalorder %s26, 1
      %p82 = por %p80, %p81
      %p84 = scmp.ne.s32.totalorder %s69, %s83
      %p85 = scmp.eq.s32.totalorder %s26, 0
      %p86 = por %p84, %p85
      %s87 = ssub.s32 %s27, %s39
      %s88 = ssub.s32 %s28, %s35
      %s89 = sor.u32 %s87, %s88
      %p90 = scmp.eq.s32.totalorder %s89, 0
      %s92 = sadd.s32 %s91, 1
      %s93 = scalar_select %p90, %s91, %s92
      %p96 = pneg %p90
      %p97 = scmp.eq.s32.totalorder %s20, 1
      %p98 = por %p96, %p97
      %p99 = scmp.ne.s32.totalorder %s91, %s94
      %p100 = scmp.eq.s32.totalorder %s20, 0
      %p101 = por %p99, %p100
      %p102 = scmp.ne.s32.totalorder %s91, %s94
      %p103 = scmp.eq.s32.totalorder %s25, 1
      %p104 = por %p102, %p103
      %p105 = scmp.ne.s32.totalorder %s94, %s95
      %p106 = scmp.eq.s32.totalorder %s25, 0
      %p107 = por %p105, %p106
      %p108 = scmp.ne.s32.totalorder %s94, %s95
      %p109 = scmp.eq.s32.totalorder %s26, 1
      %p110 = por %p108, %p109
      %p112 = scmp.ne.s32.totalorder %s95, %s111
      %p113 = scmp.eq.s32.totalorder %s26, 0
      %p114 = por %p112, %p113
      %s115 = sadd.s32 %s27, %s28
      %s116 = sadd.s32 %s39, %s35
      %s117 = ssub.s32 %s115, %s116
      %p118 = scmp.eq.s32.totalorder %s117, 0
      %s120 = sadd.s32 %s119, 1
      %s121 = scalar_select %p118, %s119, %s120
      %p124 = pneg %p118
      %p125 = scmp.eq.s32.totalorder %s20, 1
      %p126 = por %p124, %p125
      %p127 = scmp.ne.s32.totalorder %s119, %s122
      %p128 = scmp.eq.s32.totalorder %s20, 0
      %p129 = por %p127, %p128
      %p130 = scmp.ne.s32.totalorder %s119, %s122
      %p131 = scmp.eq.s32.totalorder %s25, 1
      %p132 = por %p130, %p131
      %p133 = scmp.ne.s32.totalorder %s122, %s123
      %p134 = scmp.eq.s32.totalorder %s25, 0
      %p135 = por %p133, %p134
      %p136 = scmp.ne.s32.totalorder %s122, %s123
      %p137 = scmp.eq.s32.totalorder %s26, 1
      %p138 = por %p136, %p137
      %p140 = scmp.ne.s32.totalorder %s123, %s139
      %p141 = scmp.eq.s32.totalorder %s26, 0
      %p142 = por %p140, %p141
      %p143 = scmp.le.s32.totalorder 1, %s20
      %p144 = scmp.lt.s32.totalorder %s20, 3
      %p145 = pnand %p143, %p144
      %p146 = pneg %p145
      // Predicated region
      $region9: #{tpu_custom_call.1} parent=5 // pred_check
        _
      $region10: #{tpu_custom_call.1} parent=5 // pred_check_branch
        %148 = sbr.rel (%p145) target = $region12
      $region11: #{tpu_custom_call.1} parent=5 // pred_region
        %s149 = ssub.s32 %s20, 1
        // Predicated region
        $region13: #{tpu_custom_call.1} parent=11 // pred_check
          %p150 = pneg %p79
        $region14: #{tpu_custom_call.1} parent=11 // pred_check_branch
          %152 = sbr.rel (%p150) target = $region16
        $region15: #{tpu_custom_call.1} parent=11 // pred_region
          %s154 = ssub.s32 1024, 1024
          %155 = vsyncadd [#allocation8], %s154
          %s156 = sshll.u32 [#allocation7], 4
          %s157 = int_to_ptr.vmem [resolvable:$true] %s156
          %162 = dma.hbm_to_vmem [thread:$0]  %s1, 1024, %s157, [#allocation8], 64, 64, 4
        $region16: #{tpu_custom_call.1} parent=11 // pred_fallthru
          _
      $region12: #{tpu_custom_call.1} parent=5 // pred_fallthru
        _
      %p163 = scmp.lt.s32.totalorder %s20, 2
      // Predicated region
      $region17: #{tpu_custom_call.1} parent=5 // pred_check
        %p164 = pneg %p163
      $region18: #{tpu_custom_call.1} parent=5 // pred_check_branch
        %166 = sbr.rel (%p164) target = $region20
      $region19: #{tpu_custom_call.1} parent=5 // pred_region
        // Predicated region
        $region21: #{tpu_custom_call.1} parent=19 // pred_check
          %p167 = pneg %p52
        $region22: #{tpu_custom_call.1} parent=19 // pred_check_branch
          %169 = sbr.rel (%p167) target = $region24
        $region23: #{tpu_custom_call.1} parent=19 // pred_region
          %s170 = sand.u32 %s42, 1
          %s171 = scalar_lea.sflag [#allocation5], %s170
          %s172 = sand.u32 %s42, 1
          %s173 = smul.addr %s172, 8
          %s174 = scalar_lea.vmem [#allocation4], %s173
          %s176 = ssub.s32 128, 128
          %177 = vsyncadd %s171, %s176
          %s178 = smul.addr %s27, 2
          %s179 = smul.addr %s178, 64
          %s180 = scalar_lea.hbm %s0, %s179
          %s181 = sshll.u32 %s174, 4
          %s182 = int_to_ptr.vmem [resolvable:$true] %s181
          %187 = dma.hbm_to_vmem [thread:$0]  %s180, 128, %s182, %s171, 64, 64, 4
        $region24: #{tpu_custom_call.1} parent=19 // pred_fallthru
          _
      $region20: #{tpu_custom_call.1} parent=5 // pred_fallthru
        _
      %p188 = scmp.le.s32.totalorder 1, %s20
      %p189 = scmp.lt.s32.totalorder %s20, 3
      %p190 = pnand %p188, %p189
      %p191 = pneg %p190
      // Predicated region
      $region25: #{tpu_custom_call.1} parent=5 // pred_check
        _
      $region26: #{tpu_custom_call.1} parent=5 // pred_check_branch
        %193 = sbr.rel (%p190) target = $region28
      $region27: #{tpu_custom_call.1} parent=5 // pred_region
        %s194 = ssub.s32 %s20, 1
        %s195 = sand.u32 %s45, 1
        %s196 = scalar_lea.sflag [#allocation5], %s195
        %s197 = sand.u32 %s45, 1
        %s198 = smul.addr %s197, 8
        %s199 = scalar_lea.vmem [#allocation4], %s198
        // Predicated region
        $region29: #{tpu_custom_call.1} parent=27 // pred_check
          %p200 = pneg %p58
        $region30: #{tpu_custom_call.1} parent=27 // pred_check_branch
          %202 = sbr.rel (%p200) target = $region32
        $region31: #{tpu_custom_call.1} parent=27 // pred_region
          %203 = dma.done %s196, 128
        $region32: #{tpu_custom_call.1} parent=27 // pred_fallthru
          _
        // Predicated region
        $region33: #{tpu_custom_call.1} parent=27 // pred_check
          %p204 = pneg %p79
        $region34: #{tpu_custom_call.1} parent=27 // pred_check_branch
          %206 = sbr.rel (%p204) target = $region36
        $region35: #{tpu_custom_call.1} parent=27 // pred_region
          %207 = dma.done [#allocation8], 1024
        $region36: #{tpu_custom_call.1} parent=27 // pred_fallthru
          _
        %s208 = sand.u32 %s45, 1
        %s209 = scalar_lea.sflag [#allocation5], %s208
        %s210 = sand.u32 %s45, 1
        %s211 = smul.addr %s210, 8
        %s212 = scalar_lea.vmem [#allocation4], %s211
        %p213 = pneg %p58
        %p214 = pneg %p55
        %p215 = pneg %p79
        %p216 = pneg %p76
        %p217 = pneg %p107
        %p218 = pneg %p104
        %s219 = sand.u32 %s94, 1
        %s220 = scalar_lea.sflag [#allocation6], %s219
        %s221 = sand.u32 %s94, 1
        %s222 = smul.addr %s221, 8
        %s223 = scalar_lea.vmem [#allocation9], %s222
        %p224 = pneg %p135
        %p225 = pneg %p132
        %s226 = sand.u32 %s122, 1
        %s227 = scalar_lea.sflag [#allocation11], %s226
        %s228 = sand.u32 %s122, 1
        %s229 = smul.addr %s228, 2
        %s230 = scalar_lea.vmem [#allocation10], %s229
        %s231 = smul.u32 2, %s30
        %s232 = sadd.s32 %s29, %s30
        %p234 = scmp.eq.s32.totalorder %s30, 0
        // Predicated region
        $region37: #{tpu_custom_call.1} parent=27 // pred_check
          %p235 = pneg %p234
        $region38: #{tpu_custom_call.1} parent=27 // pred_check_branch
          %237 = sbr.rel (%p235) target = $region40
        $region39: #{tpu_custom_call.1} parent=27 // pred_region
          %vm238 = vcmask 253952
          %239 = vst.msk [vmem:[#allocation2] sm:$0x1] %vm238, 0
          %vm240 = vcmask 257025
          %241 = vst.msk [vmem:[#allocation2 + $0x8] sm:$0xe] %vm240, 0
          %v242 = vld [vmem:[%s199] sm:$0xf]
          %v243 = vld [vmem:[%s199 + $0x4] sm:$0xf]
          %vm246 = vcmask 1040384
          %vm247 = vcmask 1044484
          %vm248 = vmor %vm246, %vm247
          %v249 = vrot.slane %v242, 7
          %v250 = vrot.slane %v249, 4
          %v251 = vrot.slane %v243, 7
          %v252 = vsel %vm248, %v250, %v251
          %v253 = vrot.slane %v251, 4
          %257 = vst.msk [vmem:[#allocation2] sm:$0xe] %vm240, %v249
          %vm258 = vcmask 257024
          %259 = vst.msk [vmem:[#allocation2 + $0x4] sm:$0xf] %vm258, %v252
          %260 = vst.msk [vmem:[#allocation2 + $0x8] sm:$0x1] %vm238, %v253
          %v261 = vld [vmem:[#allocation2] sm:$0xf]
          %v262 = vld [vmem:[#allocation2 + $0x4] sm:$0xf]
          %v265 = vunpack.c.l.b16 %v261
          %v266 = vunpack.c.l.b16 %v262
          %v267 = vpack.c.b16 %v266, %v265
          %vm269 = vcmask 261120
          %270 = vst.msk [vmem:[#allocation3] sm:$0xff] %vm269, %v267
          %v271 = vld [vmem:[#allocation2] sm:$0xf]
          %v272 = vld [vmem:[#allocation2 + $0x4] sm:$0xf]
          %v273 = vld [vmem:[#allocation2 + $0x8] sm:$0x1]
          %v277 = vunpack.c.l.b16 %v271
          %v278 = vunpack.c.l.b16 %v272
          %v279 = vunpack.c.l.b16 %v273
          %v280 = vpack.c.b16 %v278, %v277
          %v281 = vpack.c.b16 %v279, %v279
          %vm282 = vsmask.f32 7424
          %v284 = vshrl.u32 %v280, 16
          %v286 = vshll.u32 %v280, 16
          %v288 = vrot.slane %v286, 1
          %v289 = vor.u32 %v284, %v288
          %v291 = vshll.u32 %v281, 16
          %v293 = vrot.slane %v291, 1
          %v294 = vsel %vm282, %v289, %v293
          %295 = vrot.lane.b32.xlu0 %v294, 32
          %v296 = vpop.permute.xlu0 %295
          %vm298 = vcmask 523520
          %299 = vst.msk [vmem:[#allocation3] sm:$0xff] %vm298, %v296
          %v300 = vld [vmem:[#allocation2] sm:$0xe]
          %v301 = vld [vmem:[#allocation2 + $0x4] sm:$0xf]
          %v302 = vld [vmem:[#allocation2 + $0x8] sm:$0x1]
          %v306 = vunpack.c.l.b16 %v300
          %v307 = vunpack.c.l.b16 %v301
          %v308 = vunpack.c.l.b16 %v302
          %v309 = vpack.c.b16 %v307, %v306
          %v310 = vpack.c.b16 %v308, %v308
          %vm311 = vcmask 1046528
          %v312 = vrot.slane %v309, 1
          %v313 = vrot.slane %v310, 1
          %v314 = vsel %vm311, %v312, %v313
          %315 = vrot.lane.b32.xlu0 %v314, 64
          %v316 = vpop.permute.xlu0 %315
          %vm318 = vcmask 785920
          %319 = vst.msk [vmem:[#allocation3] sm:$0xff] %vm318, %v316
          %v320 = vld [vmem:[#allocation2] sm:$0xe]
          %v321 = vld [vmem:[#allocation2 + $0x4] sm:$0xf]
          %v322 = vld [vmem:[#allocation2 + $0x8] sm:$0x3]
          %v326 = vunpack.c.l.b16 %v320
          %v327 = vunpack.c.l.b16 %v321
          %v328 = vunpack.c.l.b16 %v322
          %v329 = vpack.c.b16 %v327, %v326
          %v330 = vpack.c.b16 %v328, %v328
          %vm331 = vsmask.f32 6400
          %v333 = vshrl.u32 %v329, 16
          %v335 = vrot.slane %v333, 1
          %v336 = vshll.u32 %v329, 16
          %v338 = vrot.slane %v336, 2
          %v339 = vor.u32 %v335, %v338
          %v341 = vshrl.u32 %v330, 16
          %v343 = vrot.slane %v341, 1
          %v344 = vshll.u32 %v330, 16
          %v346 = vrot.slane %v344, 2
          %v347 = vor.u32 %v343, %v346
          %v348 = vsel %vm331, %v339, %v347
          %349 = vrot.lane.b32.xlu0 %v348, 96
          %v350 = vpop.permute.xlu0 %349
          %vm352 = vcmask 1048320
          %353 = vst.msk [vmem:[#allocation3] sm:$0xff] %vm352, %v350
        $region40: #{tpu_custom_call.1} parent=27 // pred_fallthru
          _
        %s354 = smul.u32 %s30, 16
        %s355 = sshra.s32 %s354, 4
        %s356 = sand.u32 %s354, 15
        %s357 = smul.addr %s355, 8
        %s358 = scalar_lea.vmem [#allocation3], %s357
        %v359 = vld [vmem:[%s358] sm:$0xff]
        %v360 = vld [vmem:[#allocation7] sm:$0xf]
        %v361 = vld [vmem:[#allocation7 + $0x4] sm:$0xf]
        %v362 = vld [vmem:[#allocation7 + $0x8] sm:$0xf]
        %v363 = vld [vmem:[#allocation7 + $0xc] sm:$0xf]
        %v364 = vld [vmem:[#allocation7 + $0x10] sm:$0xf]
        %v365 = vld [vmem:[#allocation7 + $0x14] sm:$0xf]
        %v366 = vld [vmem:[#allocation7 + $0x18] sm:$0xf]
        %v367 = vld [vmem:[#allocation7 + $0x1c] sm:$0xf]
        %v368 = vld [vmem:[#allocation7 + $0x20] sm:$0xf]
        %v369 = vld [vmem:[#allocation7 + $0x24] sm:$0xf]
        %v370 = vld [vmem:[#allocation7 + $0x28] sm:$0xf]
        %v371 = vld [vmem:[#allocation7 + $0x2c] sm:$0xf]
        %v372 = vld [vmem:[#allocation7 + $0x30] sm:$0xf]
        %v373 = vld [vmem:[#allocation7 + $0x34] sm:$0xf]
        %v374 = vld [vmem:[#allocation7 + $0x38] sm:$0xf]
        %v375 = vld [vmem:[#allocation7 + $0x3c] sm:$0xf]
        %v392 = vunpack.c.l.b16 %v360
        %v393 = vunpack.c.l.b16 %v361
        %v394 = vunpack.c.l.b16 %v362
        %v395 = vunpack.c.l.b16 %v363
        %v396 = vunpack.c.l.b16 %v364
        %v397 = vunpack.c.l.b16 %v365
        %v398 = vunpack.c.l.b16 %v366
        %v399 = vunpack.c.l.b16 %v367
        %v400 = vunpack.c.l.b16 %v368
        %v401 = vunpack.c.l.b16 %v369
        %v402 = vunpack.c.l.b16 %v370
        %v403 = vunpack.c.l.b16 %v371
        %v404 = vunpack.c.l.b16 %v372
        %v405 = vunpack.c.l.b16 %v373
        %v406 = vunpack.c.l.b16 %v374
        %v407 = vunpack.c.l.b16 %v375
        %v408 = vpack.c.b16 %v393, %v392
        %v409 = vpack.c.b16 %v395, %v394
        %v410 = vpack.c.b16 %v397, %v396
        %v411 = vpack.c.b16 %v399, %v398
        %v412 = vpack.c.b16 %v401, %v400
        %v413 = vpack.c.b16 %v403, %v402
        %v414 = vpack.c.b16 %v405, %v404
        %v415 = vpack.c.b16 %v407, %v406
        %424 = vmatprep.subr.bf16.mxu0 0
        %425 = vmatpush1.bf16.msra.mxu0 %v408
        %426 = vmatprep.subr.bf16.mxu0 0
        %427 = vmatpush1.bf16.msra.mxu0 %v409
        %428 = vmatprep.subr.bf16.mxu0 0
        %429 = vmatpush1.bf16.msra.mxu0 %v410
        %430 = vmatprep.subr.bf16.mxu0 0
        %431 = vmatpush1.bf16.msra.mxu0 %v411
        %432 = vmatprep.subr.bf16.mxu0 0
        %433 = vmatpush1.bf16.msra.mxu0 %v412
        %434 = vmatprep.subr.bf16.mxu0 0
        %435 = vmatpush1.bf16.msra.mxu0 %v413
        %436 = vmatprep.subr.bf16.mxu0 0
        %437 = vmatpush1.bf16.msra.mxu0 %v414
        %438 = vmatprep.subr.bf16.mxu0 0
        %439 = vmatpush1.bf16.msra.mxu0 %v415
        %440 = vmatprep.subr.bf16.mxu0 0
        %441 = vmatpush1.bf16.msra.mxu0 0
        %442 = vmatprep.subr.bf16.mxu0 0
        %443 = vmatpush1.bf16.msra.mxu0 0
        %444 = vmatprep.subr.bf16.mxu0 0
        %445 = vmatpush1.bf16.msra.mxu0 0
        %446 = vmatprep.subr.bf16.mxu0 0
        %447 = vmatpush1.bf16.msra.mxu0 0
        %448 = vmatprep.subr.bf16.mxu0 0
        %449 = vmatpush1.bf16.msra.mxu0 0
        %450 = vmatprep.subr.bf16.mxu0 0
        %451 = vmatpush1.bf16.msra.mxu0 0
        %452 = vmatprep.subr.bf16.mxu0 0
        %453 = vmatpush1.bf16.msra.mxu0 0
        %454 = vmatprep.subr.bf16.mxu0 0
        %455 = vmatpush1.bf16.msra.mxu0 0
        %456 = vmatprep.mubr.bf16.mxu0 0
        %457 = vmatmul.mubr.bf16.gmra.mrb[0].mxu0 %v359
        %v458 = vpop.f32.mrb[0].mxu0
        %v459 = vadd.f32 0.0, %v458
        %v460 = vpop.f32.mrb[0].mxu0
        %v461 = vpop.f32.mrb[0].mxu0
        %v462 = vadd.f32 0.0, %v461
        %v463 = vpop.f32.mrb[0].mxu0
        %464 = vdwg.mxu0
        %v465 = vmax.f32 %v459, 0.0
        %v466 = vmax.f32 %v462, 0.0
        %v467 = vpack.c.bf16 %v466, %v465
        %v469 = vunpack.c.l.b16 %v467
        %v470 = vunpack.c.h.b16 %v467
        %v471 = vpack.c.b16 %v469, %v469
        %v472 = vpack.c.b16 %v470, %v470
        %475 = vst [vmem:[%s223] sm:$0xf] %v471
        %476 = vst [vmem:[%s223 + $0x4] sm:$0xf] %v472
        %v477 = vlaneseq
        %v478 = vshrl.u32 %v477, 7
        %v479 = vadd.s32 %v478, 8
        %v480 = vstv %s354
        %v481 = vadd.s32 %v478, %v480
        %v482 = vadd.s32 %v479, %v480
        %vm483 = vcmp.lt.s32.totalorder %v481, 16
        %vm484 = vcmp.lt.s32.totalorder %v482, 16
        %v485 = vsel %vm483, %v465, 0.0
        %v486 = vsel %vm484, %v466, 0.0
        %v487 = vadd.f32 %v485, %v486
        %v488 = vrot.slane %v487, 4
        %v489 = vadd.f32 %v487, %v488
        %v490 = vrot.slane %v489, 2
        %v491 = vadd.f32 %v489, %v490
        %v492 = vrot.slane %v491, 1
        %v493 = vadd.f32 %v491, %v492
        %v494 = vmul.f32 %v485, %v485
        %v495 = vmul.f32 %v486, %v486
        %v496 = vadd.f32 %v494, %v495
        %v497 = vrot.slane %v496, 4
        %v498 = vadd.f32 %v496, %v497
        %v499 = vrot.slane %v498, 2
        %v500 = vadd.f32 %v498, %v499
        %v501 = vrot.slane %v500, 1
        %v502 = vadd.f32 %v500, %v501
        %vm503 = vcmask 1040384
        %v504 = vsel %vm503, %v493, %v502
        %505 = vst [vmem:[%s230] sm:$0x3] %v504
        %s506 = sand.u32 %s94, 1
        %s507 = scalar_lea.sflag [#allocation6], %s506
        %s508 = sand.u32 %s94, 1
        %s509 = smul.addr %s508, 8
        %s510 = scalar_lea.vmem [#allocation9], %s509
        %s511 = sand.u32 %s122, 1
        %s512 = scalar_lea.sflag [#allocation11], %s511
        %s513 = sand.u32 %s122, 1
        %s514 = smul.addr %s513, 2
        %s515 = scalar_lea.vmem [#allocation10], %s514
        // Predicated region
        $region41: #{tpu_custom_call.1} parent=27 // pred_check
          %p516 = pneg %p104
        $region42: #{tpu_custom_call.1} parent=27 // pred_check_branch
          %518 = sbr.rel (%p516) target = $region44
        $region43: #{tpu_custom_call.1} parent=27 // pred_region
          %s519 = smul.u32 2, %s30
          %s521 = ssub.s32 128, 128
          %522 = vsyncadd %s507, %s521
          %s523 = smul.addr %s29, 2
          %s524 = sadd.s32 %s519, %s523
          %s525 = smul.addr %s524, 64
          %s526 = scalar_lea.hbm %s2, %s525
          %s527 = sshll.u32 %s510, 4
          %s528 = int_to_ptr.vmem [resolvable:$true] %s527
          %533 = dma.vmem_to_hbm [thread:$0]  %s528, 128, %s526, %s507, 64, 64, 4
        $region44: #{tpu_custom_call.1} parent=27 // pred_fallthru
          _
        // Predicated region
        $region45: #{tpu_custom_call.1} parent=27 // pred_check
          %p534 = pneg %p132
        $region46: #{tpu_custom_call.1} parent=27 // pred_check_branch
          %536 = sbr.rel (%p534) target = $region48
        $region47: #{tpu_custom_call.1} parent=27 // pred_region
          %s537 = sadd.s32 %s29, %s30
          %s539 = ssub.s32 32, 32
          %540 = vsyncadd %s512, %s539
          %s541 = smul.addr %s537, 32
          %s542 = scalar_lea.hbm %s3, %s541
          %s544 = sshll.u32 %s515, 4
          %s545 = int_to_ptr.vmem [resolvable:$true] %s544
          %547 = dma.vmem_to_hbm [thread:$0]  %s545, 32, %s542, %s512
        $region48: #{tpu_custom_call.1} parent=27 // pred_fallthru
          _
      $region28: #{tpu_custom_call.1} parent=5 // pred_fallthru
        _
      %p548 = scmp.le.s32.totalorder 2, %s20
      // Predicated region
      $region49: #{tpu_custom_call.1} parent=5 // pred_check
        %p549 = pneg %p548
      $region50: #{tpu_custom_call.1} parent=5 // pred_check_branch
        %551 = sbr.rel (%p549) target = $region52
      $region51: #{tpu_custom_call.1} parent=5 // pred_region
        %s552 = ssub.s32 %s20, 2
        // Predicated region
        $region53: #{tpu_custom_call.1} parent=51 // pred_check
          %p553 = pneg %p110
        $region54: #{tpu_custom_call.1} parent=51 // pred_check_branch
          %555 = sbr.rel (%p553) target = $region56
        $region55: #{tpu_custom_call.1} parent=51 // pred_region
          %s556 = sand.u32 %s95, 1
          %s557 = scalar_lea.sflag [#allocation6], %s556
          %s558 = sand.u32 %s95, 1
          %s559 = smul.addr %s558, 8
          %s560 = scalar_lea.vmem [#allocation9], %s559
          %561 = dma.done %s557, 128
        $region56: #{tpu_custom_call.1} parent=51 // pred_fallthru
          _
        // Predicated region
        $region57: #{tpu_custom_call.1} parent=51 // pred_check
          %p562 = pneg %p138
        $region58: #{tpu_custom_call.1} parent=51 // pred_check_branch
          %564 = sbr.rel (%p562) target = $region60
        $region59: #{tpu_custom_call.1} parent=51 // pred_region
          %s565 = sand.u32 %s123, 1
          %s566 = scalar_lea.sflag [#allocation11], %s565
          %s567 = sand.u32 %s123, 1
          %s568 = smul.addr %s567, 2
          %s569 = scalar_lea.vmem [#allocation10], %s568
          %570 = dma.done %s566, 32
        $region60: #{tpu_custom_call.1} parent=51 // pred_fallthru
          _
      $region52: #{tpu_custom_call.1} parent=5 // pred_fallthru
        _
    $region6: #{tpu_custom_call.1} parent=1 // loop_footer
      %s24 = sadd.s32 1, %s20
    $region7: #{tpu_custom_call.1} parent=1 // loop_footer_branch
      %19 = sbr.rel target = $region3
    $region8: #{tpu_custom_call.1} parent=1 // loop_exit
      _
    %571 = vsyncpa [#allocation5], 1
    %s572 = scalar_lea.sflag [#allocation5], 1
    %573 = vsyncpa %s572, 1
    %574 = vsyncpa [#allocation8], 1
    %575 = vsyncpa [#allocation6], 1
    %s576 = scalar_lea.sflag [#allocation6], 1
    %577 = vsyncpa %s576, 1
    %578 = vsyncpa [#allocation11], 1
    %s579 = scalar_lea.sflag [#allocation11], 1
    %580 = vsyncpa %s579, 1

</llo_original>
